<compile_context>
chip_gen: v5e
topology: v5e:2x2
jax: 0.10.0
libtpu: 0.0.40
codegen_flags: <defaults>
</compile_context>

<pallas_src>
import jax
import jax.numpy as jnp
from jax import lax
from jax.experimental import pallas as pl
from jax.experimental.pallas import tpu as pltpu


def _attention_kernel(x_ref, w_ref, u_ref, o_ref):
    # x_ref: (bb*N, F)     positions-as-rows for a block of bb batch elements
    # w_ref: (F, D)        lane-dense attention weight (D = 256)
    # u_ref: (C, D)
    # o_ref: (1, C, bb*F)  lane-dense output slab (f32)
    f_dim = x_ref.shape[1]
    bb = o_ref.shape[2] // f_dim
    n_pos = x_ref.shape[0] // bb

    xb = x_ref[...]                                   # (bb*N, F)  compute dtype
    wt = w_ref[...]                                   # (F, D)
    u = u_ref[...]                                    # (C, D)

    # One lane-dense MXU matmul for the whole batch block (M = bb*N rows),
    # f32 accumulate.  NOTE(v5e): tanh/exp land on the single f32-only EUP,
    # which is the likely first-saturating unit there at large bb*N.
    z = jnp.tanh(jnp.dot(xb, wt, preferred_element_type=jnp.float32))      # (bb*N, D) f32

    # Scores computed already transposed: (C, bb*N).  Both operands contract
    # their minor D dim (rhs-transposed form, MXU native); the softmax
    # max/sum below then run along the natural lane axis with NO per-batch
    # XLU transposes inside the loop.
    s_t = lax.dot_general(u, z.astype(u.dtype), (((1,), (1,)), ((), ())),
                          preferred_element_type=jnp.float32)              # (C, bb*N)

    # Per-batch softmax over positions + output contraction.  bb is a small
    # static int (capped by the wrapper heuristic), so this unrolls with tiny
    # per-iteration live sets.  Results are packed along lanes into a
    # (C, bb*F) slab so the output store is a single unmasked lane-dense write.
    slabs = []
    for b in range(bb):
        r0 = b * n_pos
        s_b = s_t[:, r0:r0 + n_pos]                                         # (C, N) f32
        x_b = xb[r0:r0 + n_pos, :]                                          # (N, F)

        m = jnp.max(s_b, axis=-1, keepdims=True)
        e = jnp.exp(s_b - m)
        denom = jnp.sum(e, axis=-1, keepdims=True)
        a_b = e * pl.reciprocal(denom, approx=True)                         # (C, N) f32

        # V_b = A_b @ X_b : contract positions, (C, F) produced directly.
        slabs.append(jnp.dot(a_b.astype(x_b.dtype), x_b,
                             preferred_element_type=jnp.float32))           # (C, F) f32

    slab = jnp.concatenate(slabs, axis=-1)                                  # (C, bb*F)
    o_ref[0] = slab.astype(o_ref.dtype)


def _choose_batch_block(B, N, F, D, C, itemsize=2,
                        budget_bytes=24 << 20, max_unroll=16):
    """Pick how many batch elements to fold per grid step.

    Targets: (a) fill the MXU M dim (>=256 rows per step when B allows),
    (b) prefer a single grid step (the grid is a sequential loop on 1-TC
    chips and splitting sub-microsecond work across v7x's 2 TCs is net
    negative), (c) keep the per-step working set -- dominated by the
    (rows, 256) f32 z intermediate -- under a conservative VMEM budget that
    also fits v7x's 32 MiB scoped default, and (d) honor the (8,128) sublane
    rule for the (rows, F) x block.
    """
    def fits(bb):
        rows = bb * N
        x_blk = rows * F * itemsize * 2            # double-buffered input tile
        z_blk = rows * D * 4                       # f32 z intermediate
        s_blk = C * rows * 4                       # f32 scores
        o_blk = C * bb * F * 4 * 2                 # double-buffered output slab
        wu_blk = (F * D + C * D) * itemsize * 2    # broadcast weights
        return x_blk + z_blk + s_blk + o_blk + wu_blk <= budget_bytes

    best = 1
    for bb in range(1, B + 1):
        if B % bb:
            continue
        if bb > max_unroll:                        # cap the static unroll
            continue
        if bb != B and (bb * N) % 8:               # (8,128) sublane rule
            continue
        if not fits(bb):
            continue
        best = bb
    return best


def attention_layer(x, w, u, *, batch_block=None, compute_dtype=jnp.bfloat16):
    """x: (B, F, N), w: (D, F), u: (C, D) -> (B, C, F) in x.dtype (f32 accumulate)."""
    B, F, N = x.shape
    D, Fw = w.shape
    C, Du = u.shape
    assert Fw == F and Du == D

    itemsize = jnp.dtype(compute_dtype).itemsize
    if batch_block is None:
        batch_block = _choose_batch_block(B, N, F, D, C, itemsize=itemsize)
    assert B % batch_block == 0
    assert batch_block == B or (batch_block * N) % 8 == 0, (
        "block rows must be a multiple of 8 (or the full B*N) for the "
        "(8,128) tiling rule")
    grid_b = B // batch_block

    # One-time layout plumbing, fused with the compute-dtype cast so the extra
    # HBM pass over x writes half the bytes when staging bf16: positions-as-rows
    # x and a lane-dense (F, D) weight.
    x_rows = jnp.transpose(x, (0, 2, 1)).reshape(B * N, F).astype(compute_dtype)
    w_t = jnp.transpose(w).astype(compute_dtype)
    u_c = u.astype(compute_dtype)

    slab = pl.pallas_call(
        _attention_kernel,
        out_shape=jax.ShapeDtypeStruct((grid_b, C, batch_block * F), jnp.float32),
        grid=(grid_b,),
        in_specs=[
            pl.BlockSpec((batch_block * N, F), lambda i: (i, 0)),   # x rows block
            pl.BlockSpec((F, D), lambda i: (0, 0)),                 # w^T (broadcast)
            pl.BlockSpec((C, D), lambda i: (0, 0)),                 # u   (broadcast)
        ],
        out_specs=pl.BlockSpec((1, C, batch_block * F), lambda i: (i, 0, 0)),
        compiler_params=pltpu.CompilerParams(
            # Free annotation on 1-TC chips; lets v7x shard the batch axis
            # across its 2 TCs whenever grid_b > 1.
            dimension_semantics=("parallel",),
            vmem_limit_bytes=32 * 1024 * 1024,
        ),
    )(x_rows, w_t, u_c)

    # Undo the lane-packing: (grid_b, C, bb*F) -> (B, C, F).
    out = slab.reshape(grid_b, C, batch_block, F)
    out = jnp.transpose(out, (0, 2, 1, 3)).reshape(B, C, F)
    return out.astype(x.dtype)


def _xavier_uniform(key, shape, dtype=jnp.float32):
    fan_out, fan_in = shape  # matches torch xavier_uniform_ on a 2-D param
    bound = (6.0 / (fan_in + fan_out)) ** 0.5
    return jax.random.uniform(key, shape, dtype=dtype, minval=-bound, maxval=bound)


def _reference(x, w, u):
    z = jnp.tanh(jnp.einsum("df,bfn->bdn", w, x))
    s = jnp.einsum("cd,bdn->bcn", u, z)
    a = jax.nn.softmax(s, axis=2)
    v = jnp.einsum("bfn,bcn->bfc", x, a)
    return jnp.transpose(v, (0, 2, 1))


if __name__ == "__main__":
    # Shapes consistent with the module: num_filter_maps=32, class_num=8,
    # attn_d=256 (fixed in the module), positions N=16, batch=8 so the
    # batch-folded block fills 128 MXU rows in a single grid step.
    B, F, N, C, D = 8, 32, 16, 8, 256

    key = jax.random.PRNGKey(0)
    kx, kw, ku = jax.random.split(key, 3)

    x = jax.random.normal(kx, (B, F, N), dtype=jnp.float32)
    w = _xavier_uniform(kw, (D, F))   # nn.Parameter(attn_d, num_filter_maps)
    u = _xavier_uniform(ku, (C, D))   # nn.Parameter(class_num, attn_d)

    out = attention_layer(x, w, u)
    out = jax.block_until_ready(out)

    ref = _reference(x, w, u)
    assert out.shape == (B, C, F), out.shape
    # bf16-staged MXU operands (f32 accumulation) plus the approx reciprocal
    # cost ~1e-2 relative accuracy vs the exact f32 reference.
    assert jnp.allclose(out, ref, atol=3e-2, rtol=3e-2), "mismatch vs reference"

    print("KERNEL_OK")
</pallas_src>

<mosaic_0001>
module attributes {stable_mosaic.version = 11 : i64} {
  func.func @_attention_kernel(%arg0: i32, %arg1: memref<128x32xbf16, #tpu.memory_space<vmem>>, %arg2: memref<32x256xbf16, #tpu.memory_space<vmem>>, %arg3: memref<8x256xbf16, #tpu.memory_space<vmem>>, %arg4: memref<1x8x256xf32, #tpu.memory_space<vmem>>) attributes {dimension_semantics = [#tpu.dimension_semantics<parallel>], iteration_bounds = array<i64: 1>, scalar_prefetch = 0 : i64, scratch_operands = 0 : i64, tpu.core_type = #tpu.core_type<tc>, window_params = [{transform_indices = @transform_0, window_bounds = array<i64: 128, 32>}, {pipeline_mode = #tpu.pipeline_mode<synchronous>, transform_indices = @transform_1, window_bounds = array<i64: 32, 256>}, {pipeline_mode = #tpu.pipeline_mode<synchronous>, transform_indices = @transform_2, window_bounds = array<i64: 8, 256>}, {transform_indices = @transform_3, window_bounds = array<i64: 1, 8, 256>}]} {
    %c0 = arith.constant 0 : index
    %c0_0 = arith.constant 0 : index
    %0 = vector.load %arg1[%c0, %c0_0] : memref<128x32xbf16, #tpu.memory_space<vmem>>, vector<128x32xbf16>
    %c0_1 = arith.constant 0 : index
    %c0_2 = arith.constant 0 : index
    %1 = vector.load %arg2[%c0_1, %c0_2] : memref<32x256xbf16, #tpu.memory_space<vmem>>, vector<32x256xbf16>
    %c0_3 = arith.constant 0 : index
    %c0_4 = arith.constant 0 : index
    %2 = vector.load %arg3[%c0_3, %c0_4] : memref<8x256xbf16, #tpu.memory_space<vmem>>, vector<8x256xbf16>
    %cst = arith.constant dense<0.000000e+00> : vector<128x256xf32>
    %3 = tpu.matmul %0, %1, %cst {dimension_numbers = #tpu.dot_dimension_numbers<[1], [0], [0], [1], [0, 0, 1, 1], [], []>} : vector<128x32xbf16>, vector<32x256xbf16>, vector<128x256xf32> -> vector<128x256xf32>
    %4 = math.tanh %3 : vector<128x256xf32>
    %5 = arith.truncf %4 : vector<128x256xf32> to vector<128x256xbf16>
    %cst_5 = arith.constant dense<0.000000e+00> : vector<8x128xf32>
    %6 = tpu.matmul %2, %5, %cst_5 {dimension_numbers = #tpu.dot_dimension_numbers<[1], [1], [0], [0], [0, 0, 1, 0], [], []>} : vector<8x256xbf16>, vector<128x256xbf16>, vector<8x128xf32> -> vector<8x128xf32>
    %7 = vector.extract_strided_slice %6 {offsets = [0, 0], sizes = [8, 16], strides = [1, 1]} : vector<8x128xf32> to vector<8x16xf32>
    %8 = vector.extract_strided_slice %0 {offsets = [0, 0], sizes = [16, 32], strides = [1, 1]} : vector<128x32xbf16> to vector<16x32xbf16>
    %cst_6 = arith.constant dense<0xFF800000> : vector<8xf32>
    %9 = vector.multi_reduction <maximumf>, %7, %cst_6 [1] : vector<8x16xf32> to vector<8xf32>
    %10 = vector.shape_cast %9 : vector<8xf32> to vector<8x1xf32>
    %11 = vector.broadcast %10 : vector<8x1xf32> to vector<8x16xf32>
    %12 = arith.subf %7, %11 : vector<8x16xf32>
    %13 = math.exp %12 : vector<8x16xf32>
    %cst_7 = arith.constant dense<0.000000e+00> : vector<8xf32>
    %14 = vector.multi_reduction <add>, %13, %cst_7 [1] : vector<8x16xf32> to vector<8xf32>
    %15 = vector.shape_cast %14 : vector<8xf32> to vector<8x1xf32>
    %16 = tpu.reciprocal %15 {approx = true} : vector<8x1xf32> -> vector<8x1xf32>
    %17 = vector.broadcast %16 : vector<8x1xf32> to vector<8x16xf32>
    %18 = arith.mulf %13, %17 : vector<8x16xf32>
    %19 = arith.truncf %18 : vector<8x16xf32> to vector<8x16xbf16>
    %cst_8 = arith.constant dense<0.000000e+00> : vector<8x32xf32>
    %20 = tpu.matmul %19, %8, %cst_8 {dimension_numbers = #tpu.dot_dimension_numbers<[1], [0], [0], [1], [0, 0, 1, 1], [], []>} : vector<8x16xbf16>, vector<16x32xbf16>, vector<8x32xf32> -> vector<8x32xf32>
    %21 = vector.extract_strided_slice %6 {offsets = [0, 16], sizes = [8, 16], strides = [1, 1]} : vector<8x128xf32> to vector<8x16xf32>
    %22 = vector.extract_strided_slice %0 {offsets = [16, 0], sizes = [16, 32], strides = [1, 1]} : vector<128x32xbf16> to vector<16x32xbf16>
    %cst_9 = arith.constant dense<0xFF800000> : vector<8xf32>
    %23 = vector.multi_reduction <maximumf>, %21, %cst_9 [1] : vector<8x16xf32> to vector<8xf32>
    %24 = vector.shape_cast %23 : vector<8xf32> to vector<8x1xf32>
    %25 = vector.broadcast %24 : vector<8x1xf32> to vector<8x16xf32>
    %26 = arith.subf %21, %25 : vector<8x16xf32>
    %27 = math.exp %26 : vector<8x16xf32>
    %cst_10 = arith.constant dense<0.000000e+00> : vector<8xf32>
    %28 = vector.multi_reduction <add>, %27, %cst_10 [1] : vector<8x16xf32> to vector<8xf32>
    %29 = vector.shape_cast %28 : vector<8xf32> to vector<8x1xf32>
    %30 = tpu.reciprocal %29 {approx = true} : vector<8x1xf32> -> vector<8x1xf32>
    %31 = vector.broadcast %30 : vector<8x1xf32> to vector<8x16xf32>
    %32 = arith.mulf %27, %31 : vector<8x16xf32>
    %33 = arith.truncf %32 : vector<8x16xf32> to vector<8x16xbf16>
    %cst_11 = arith.constant dense<0.000000e+00> : vector<8x32xf32>
    %34 = tpu.matmul %33, %22, %cst_11 {dimension_numbers = #tpu.dot_dimension_numbers<[1], [0], [0], [1], [0, 0, 1, 1], [], []>} : vector<8x16xbf16>, vector<16x32xbf16>, vector<8x32xf32> -> vector<8x32xf32>
    %35 = vector.extract_strided_slice %6 {offsets = [0, 32], sizes = [8, 16], strides = [1, 1]} : vector<8x128xf32> to vector<8x16xf32>
    %36 = vector.extract_strided_slice %0 {offsets = [32, 0], sizes = [16, 32], strides = [1, 1]} : vector<128x32xbf16> to vector<16x32xbf16>
    %cst_12 = arith.constant dense<0xFF800000> : vector<8xf32>
    %37 = vector.multi_reduction <maximumf>, %35, %cst_12 [1] : vector<8x16xf32> to vector<8xf32>
    %38 = vector.shape_cast %37 : vector<8xf32> to vector<8x1xf32>
    %39 = vector.broadcast %38 : vector<8x1xf32> to vector<8x16xf32>
    %40 = arith.subf %35, %39 : vector<8x16xf32>
    %41 = math.exp %40 : vector<8x16xf32>
    %cst_13 = arith.constant dense<0.000000e+00> : vector<8xf32>
    %42 = vector.multi_reduction <add>, %41, %cst_13 [1] : vector<8x16xf32> to vector<8xf32>
    %43 = vector.shape_cast %42 : vector<8xf32> to vector<8x1xf32>
    %44 = tpu.reciprocal %43 {approx = true} : vector<8x1xf32> -> vector<8x1xf32>
    %45 = vector.broadcast %44 : vector<8x1xf32> to vector<8x16xf32>
    %46 = arith.mulf %41, %45 : vector<8x16xf32>
    %47 = arith.truncf %46 : vector<8x16xf32> to vector<8x16xbf16>
    %cst_14 = arith.constant dense<0.000000e+00> : vector<8x32xf32>
    %48 = tpu.matmul %47, %36, %cst_14 {dimension_numbers = #tpu.dot_dimension_numbers<[1], [0], [0], [1], [0, 0, 1, 1], [], []>} : vector<8x16xbf16>, vector<16x32xbf16>, vector<8x32xf32> -> vector<8x32xf32>
    %49 = vector.extract_strided_slice %6 {offsets = [0, 48], sizes = [8, 16], strides = [1, 1]} : vector<8x128xf32> to vector<8x16xf32>
    %50 = vector.extract_strided_slice %0 {offsets = [48, 0], sizes = [16, 32], strides = [1, 1]} : vector<128x32xbf16> to vector<16x32xbf16>
    %cst_15 = arith.constant dense<0xFF800000> : vector<8xf32>
    %51 = vector.multi_reduction <maximumf>, %49, %cst_15 [1] : vector<8x16xf32> to vector<8xf32>
    %52 = vector.shape_cast %51 : vector<8xf32> to vector<8x1xf32>
    %53 = vector.broadcast %52 : vector<8x1xf32> to vector<8x16xf32>
    %54 = arith.subf %49, %53 : vector<8x16xf32>
    %55 = math.exp %54 : vector<8x16xf32>
    %cst_16 = arith.constant dense<0.000000e+00> : vector<8xf32>
    %56 = vector.multi_reduction <add>, %55, %cst_16 [1] : vector<8x16xf32> to vector<8xf32>
    %57 = vector.shape_cast %56 : vector<8xf32> to vector<8x1xf32>
    %58 = tpu.reciprocal %57 {approx = true} : vector<8x1xf32> -> vector<8x1xf32>
    %59 = vector.broadcast %58 : vector<8x1xf32> to vector<8x16xf32>
    %60 = arith.mulf %55, %59 : vector<8x16xf32>
    %61 = arith.truncf %60 : vector<8x16xf32> to vector<8x16xbf16>
    %cst_17 = arith.constant dense<0.000000e+00> : vector<8x32xf32>
    %62 = tpu.matmul %61, %50, %cst_17 {dimension_numbers = #tpu.dot_dimension_numbers<[1], [0], [0], [1], [0, 0, 1, 1], [], []>} : vector<8x16xbf16>, vector<16x32xbf16>, vector<8x32xf32> -> vector<8x32xf32>
    %63 = vector.extract_strided_slice %6 {offsets = [0, 64], sizes = [8, 16], strides = [1, 1]} : vector<8x128xf32> to vector<8x16xf32>
    %64 = vector.extract_strided_slice %0 {offsets = [64, 0], sizes = [16, 32], strides = [1, 1]} : vector<128x32xbf16> to vector<16x32xbf16>
    %cst_18 = arith.constant dense<0xFF800000> : vector<8xf32>
    %65 = vector.multi_reduction <maximumf>, %63, %cst_18 [1] : vector<8x16xf32> to vector<8xf32>
    %66 = vector.shape_cast %65 : vector<8xf32> to vector<8x1xf32>
    %67 = vector.broadcast %66 : vector<8x1xf32> to vector<8x16xf32>
    %68 = arith.subf %63, %67 : vector<8x16xf32>
    %69 = math.exp %68 : vector<8x16xf32>
    %cst_19 = arith.constant dense<0.000000e+00> : vector<8xf32>
    %70 = vector.multi_reduction <add>, %69, %cst_19 [1] : vector<8x16xf32> to vector<8xf32>
    %71 = vector.shape_cast %70 : vector<8xf32> to vector<8x1xf32>
    %72 = tpu.reciprocal %71 {approx = true} : vector<8x1xf32> -> vector<8x1xf32>
    %73 = vector.broadcast %72 : vector<8x1xf32> to vector<8x16xf32>
    %74 = arith.mulf %69, %73 : vector<8x16xf32>
    %75 = arith.truncf %74 : vector<8x16xf32> to vector<8x16xbf16>
    %cst_20 = arith.constant dense<0.000000e+00> : vector<8x32xf32>
    %76 = tpu.matmul %75, %64, %cst_20 {dimension_numbers = #tpu.dot_dimension_numbers<[1], [0], [0], [1], [0, 0, 1, 1], [], []>} : vector<8x16xbf16>, vector<16x32xbf16>, vector<8x32xf32> -> vector<8x32xf32>
    %77 = vector.extract_strided_slice %6 {offsets = [0, 80], sizes = [8, 16], strides = [1, 1]} : vector<8x128xf32> to vector<8x16xf32>
    %78 = vector.extract_strided_slice %0 {offsets = [80, 0], sizes = [16, 32], strides = [1, 1]} : vector<128x32xbf16> to vector<16x32xbf16>
    %cst_21 = arith.constant dense<0xFF800000> : vector<8xf32>
    %79 = vector.multi_reduction <maximumf>, %77, %cst_21 [1] : vector<8x16xf32> to vector<8xf32>
    %80 = vector.shape_cast %79 : vector<8xf32> to vector<8x1xf32>
    %81 = vector.broadcast %80 : vector<8x1xf32> to vector<8x16xf32>
    %82 = arith.subf %77, %81 : vector<8x16xf32>
    %83 = math.exp %82 : vector<8x16xf32>
    %cst_22 = arith.constant dense<0.000000e+00> : vector<8xf32>
    %84 = vector.multi_reduction <add>, %83, %cst_22 [1] : vector<8x16xf32> to vector<8xf32>
    %85 = vector.shape_cast %84 : vector<8xf32> to vector<8x1xf32>
    %86 = tpu.reciprocal %85 {approx = true} : vector<8x1xf32> -> vector<8x1xf32>
    %87 = vector.broadcast %86 : vector<8x1xf32> to vector<8x16xf32>
    %88 = arith.mulf %83, %87 : vector<8x16xf32>
    %89 = arith.truncf %88 : vector<8x16xf32> to vector<8x16xbf16>
    %cst_23 = arith.constant dense<0.000000e+00> : vector<8x32xf32>
    %90 = tpu.matmul %89, %78, %cst_23 {dimension_numbers = #tpu.dot_dimension_numbers<[1], [0], [0], [1], [0, 0, 1, 1], [], []>} : vector<8x16xbf16>, vector<16x32xbf16>, vector<8x32xf32> -> vector<8x32xf32>
    %91 = vector.extract_strided_slice %6 {offsets = [0, 96], sizes = [8, 16], strides = [1, 1]} : vector<8x128xf32> to vector<8x16xf32>
    %92 = vector.extract_strided_slice %0 {offsets = [96, 0], sizes = [16, 32], strides = [1, 1]} : vector<128x32xbf16> to vector<16x32xbf16>
    %cst_24 = arith.constant dense<0xFF800000> : vector<8xf32>
    %93 = vector.multi_reduction <maximumf>, %91, %cst_24 [1] : vector<8x16xf32> to vector<8xf32>
    %94 = vector.shape_cast %93 : vector<8xf32> to vector<8x1xf32>
    %95 = vector.broadcast %94 : vector<8x1xf32> to vector<8x16xf32>
    %96 = arith.subf %91, %95 : vector<8x16xf32>
    %97 = math.exp %96 : vector<8x16xf32>
    %cst_25 = arith.constant dense<0.000000e+00> : vector<8xf32>
    %98 = vector.multi_reduction <add>, %97, %cst_25 [1] : vector<8x16xf32> to vector<8xf32>
    %99 = vector.shape_cast %98 : vector<8xf32> to vector<8x1xf32>
    %100 = tpu.reciprocal %99 {approx = true} : vector<8x1xf32> -> vector<8x1xf32>
    %101 = vector.broadcast %100 : vector<8x1xf32> to vector<8x16xf32>
    %102 = arith.mulf %97, %101 : vector<8x16xf32>
    %103 = arith.truncf %102 : vector<8x16xf32> to vector<8x16xbf16>
    %cst_26 = arith.constant dense<0.000000e+00> : vector<8x32xf32>
    %104 = tpu.matmul %103, %92, %cst_26 {dimension_numbers = #tpu.dot_dimension_numbers<[1], [0], [0], [1], [0, 0, 1, 1], [], []>} : vector<8x16xbf16>, vector<16x32xbf16>, vector<8x32xf32> -> vector<8x32xf32>
    %105 = vector.extract_strided_slice %6 {offsets = [0, 112], sizes = [8, 16], strides = [1, 1]} : vector<8x128xf32> to vector<8x16xf32>
    %106 = vector.extract_strided_slice %0 {offsets = [112, 0], sizes = [16, 32], strides = [1, 1]} : vector<128x32xbf16> to vector<16x32xbf16>
    %cst_27 = arith.constant dense<0xFF800000> : vector<8xf32>
    %107 = vector.multi_reduction <maximumf>, %105, %cst_27 [1] : vector<8x16xf32> to vector<8xf32>
    %108 = vector.shape_cast %107 : vector<8xf32> to vector<8x1xf32>
    %109 = vector.broadcast %108 : vector<8x1xf32> to vector<8x16xf32>
    %110 = arith.subf %105, %109 : vector<8x16xf32>
    %111 = math.exp %110 : vector<8x16xf32>
    %cst_28 = arith.constant dense<0.000000e+00> : vector<8xf32>
    %112 = vector.multi_reduction <add>, %111, %cst_28 [1] : vector<8x16xf32> to vector<8xf32>
    %113 = vector.shape_cast %112 : vector<8xf32> to vector<8x1xf32>
    %114 = tpu.reciprocal %113 {approx = true} : vector<8x1xf32> -> vector<8x1xf32>
    %115 = vector.broadcast %114 : vector<8x1xf32> to vector<8x16xf32>
    %116 = arith.mulf %111, %115 : vector<8x16xf32>
    %117 = arith.truncf %116 : vector<8x16xf32> to vector<8x16xbf16>
    %cst_29 = arith.constant dense<0.000000e+00> : vector<8x32xf32>
    %118 = tpu.matmul %117, %106, %cst_29 {dimension_numbers = #tpu.dot_dimension_numbers<[1], [0], [0], [1], [0, 0, 1, 1], [], []>} : vector<8x16xbf16>, vector<16x32xbf16>, vector<8x32xf32> -> vector<8x32xf32>
    %119 = tpu.concatenate %20, %34, %48, %62, %76, %90, %104, %118 in 1 : vector<8x32xf32>, vector<8x32xf32>, vector<8x32xf32>, vector<8x32xf32>, vector<8x32xf32>, vector<8x32xf32>, vector<8x32xf32>, vector<8x32xf32> -> vector<8x256xf32>
    %c0_30 = arith.constant 0 : index
    %c0_31 = arith.constant 0 : index
    %c0_32 = arith.constant 0 : index
    %120 = vector.load %arg4[%c0_30, %c0_31, %c0_32] : memref<1x8x256xf32, #tpu.memory_space<vmem>>, vector<1x8x256xf32>
    %121 = vector.shape_cast %120 : vector<1x8x256xf32> to vector<8x256xf32>
    %122 = vector.shape_cast %119 : vector<8x256xf32> to vector<1x8x256xf32>
    tpu.vector_store %arg4[%c0_30, %c0_31, %c0_32], %122 {strides = array<i32>} : memref<1x8x256xf32, #tpu.memory_space<vmem>>, vector<1x8x256xf32>,
    return
  }
  func.func @transform_0(%arg0: i32) -> (i32, i32) {
    %c0_i32 = arith.constant 0 : i32
    %c0_i32_0 = arith.constant 0 : i32
    return %arg0, %c0_i32 : i32, i32
  }
  func.func @transform_1(%arg0: i32) -> (i32, i32) {
    %c0_i32 = arith.constant 0 : i32
    %c0_i32_0 = arith.constant 0 : i32
    %c0_i32_1 = arith.constant 0 : i32
    return %c0_i32, %c0_i32_0 : i32, i32
  }
  func.func @transform_2(%arg0: i32) -> (i32, i32) {
    %c0_i32 = arith.constant 0 : i32
    %c0_i32_0 = arith.constant 0 : i32
    %c0_i32_1 = arith.constant 0 : i32
    return %c0_i32, %c0_i32_0 : i32, i32
  }
  func.func @transform_3(%arg0: i32) -> (i32, i32, i32) {
    %c0_i32 = arith.constant 0 : i32
    %c0_i32_0 = arith.constant 0 : i32
    %c0_i32_1 = arith.constant 0 : i32
    return %arg0, %c0_i32, %c0_i32_0 : i32, i32, i32
  }
}

</mosaic_0001>

<llo_original>
// kernel: tpu_custom_call.1
$region0: #{tpu_custom_call.1}
  #allocation0 [shape = 'u32[]', space=smem, size = 0x4, offset = 0x4, fixed_abs, tag = 'smem constant byte address 0x4 - core index']
  #allocation1 [shape = 'u32[72,128]{1,0:T(1,128)}', space=vmem, size = 0x9000, scoped, tag = 'internal scratch']
  %s0 = inlined_call_operand.vmem [shape: bf16[128,32], index: 0, kind: input, shape index: {}]
  %s1 = inlined_call_operand.vmem [shape: bf16[32,256], index: 1, kind: input, shape index: {}]
  %s2 = inlined_call_operand.vmem [shape: bf16[8,256], index: 2, kind: input, shape index: {}]
  %s3 = inlined_call_operand.hbm [shape: f32[1,8,256], index: 3, kind: output, shape index: {}]
  %s4 = sld [smem:[#allocation0]]
  $region22: #{tpu_custom_call.1} parent=0
    _
  %s6 = ssub.s32 1, %s4
  %s7 = scalar_select 0, %s6, %s4
  $region1: #{tpu_custom_call.1} parent=0
    #allocation2 [shape = 'u8[8192]{0}', space=vmem, size = 0x2000, scoped, tag = 'output window, operand 0, single buffered']
    #allocation3 [shape = 's32[1]{0}', space=sflag, size = 0x4, scoped, tag = 'scoped memory for tpu_custom_call.1']
    %8 = vsyncpa [#allocation3], 0
    // Predicated region
    $region2: #{tpu_custom_call.1} parent=1 // pred_check
      _
    $region3: #{tpu_custom_call.1} parent=1 // pred_check_branch
      %10 = sbr.rel (0) target = $region5
    $region4: #{tpu_custom_call.1} parent=1 // pred_region
      _
    $region5: #{tpu_custom_call.1} parent=1 // pred_fallthru
      _
    // Predicated region
    $region6: #{tpu_custom_call.1} parent=1 // pred_check
      _
    $region7: #{tpu_custom_call.1} parent=1 // pred_check_branch
      %12 = sbr.rel (0) target = $region9
    $region8: #{tpu_custom_call.1} parent=1 // pred_region
      _
    $region9: #{tpu_custom_call.1} parent=1 // pred_fallthru
      _
    // Predicated region
    $region10: #{tpu_custom_call.1} parent=1 // pred_check
      _
    $region11: #{tpu_custom_call.1} parent=1 // pred_check_branch
      %14 = sbr.rel (0) target = $region13
    $region12: #{tpu_custom_call.1} parent=1 // pred_region
      _
    $region13: #{tpu_custom_call.1} parent=1 // pred_fallthru
      _
    %v16 = vld [vmem:[%s0] sm:$0xf]
    %v17 = vld [vmem:[%s0 + $0x4] sm:$0xf]
    %v18 = vld [vmem:[%s0 + $0x8] sm:$0xf]
    %v19 = vld [vmem:[%s0 + $0xc] sm:$0xf]
    %v20 = vld [vmem:[%s0 + $0x10] sm:$0xf]
    %v21 = vld [vmem:[%s0 + $0x14] sm:$0xf]
    %v22 = vld [vmem:[%s0 + $0x18] sm:$0xf]
    %v23 = vld [vmem:[%s0 + $0x1c] sm:$0xf]
    %v24 = vld [vmem:[%s0 + $0x20] sm:$0xf]
    %v25 = vld [vmem:[%s0 + $0x24] sm:$0xf]
    %v26 = vld [vmem:[%s0 + $0x28] sm:$0xf]
    %v27 = vld [vmem:[%s0 + $0x2c] sm:$0xf]
    %v28 = vld [vmem:[%s0 + $0x30] sm:$0xf]
    %v29 = vld [vmem:[%s0 + $0x34] sm:$0xf]
    %v30 = vld [vmem:[%s0 + $0x38] sm:$0xf]
    %v31 = vld [vmem:[%s0 + $0x3c] sm:$0xf]
    %v32 = vld [vmem:[%s1] sm:$0xff]
    %v33 = vld [vmem:[%s1 + $0x8] sm:$0xff]
    %v34 = vld [vmem:[%s1 + $0x10] sm:$0xff]
    %v35 = vld [vmem:[%s1 + $0x18] sm:$0xff]
    %v36 = vld [vmem:[%s2] sm:$0xff]
    %v53 = vunpack.c.l.b16 %v16
    %v54 = vunpack.c.l.b16 %v17
    %v55 = vunpack.c.l.b16 %v18
    %v56 = vunpack.c.l.b16 %v19
    %v57 = vunpack.c.l.b16 %v20
    %v58 = vunpack.c.l.b16 %v21
    %v59 = vunpack.c.l.b16 %v22
    %v60 = vunpack.c.l.b16 %v23
    %v61 = vunpack.c.l.b16 %v24
    %v62 = vunpack.c.l.b16 %v25
    %v63 = vunpack.c.l.b16 %v26
    %v64 = vunpack.c.l.b16 %v27
    %v65 = vunpack.c.l.b16 %v28
    %v66 = vunpack.c.l.b16 %v29
    %v67 = vunpack.c.l.b16 %v30
    %v68 = vunpack.c.l.b16 %v31
    %v69 = vpack.c.b16 %v54, %v53
    %v70 = vpack.c.b16 %v56, %v55
    %v71 = vpack.c.b16 %v58, %v57
    %v72 = vpack.c.b16 %v60, %v59
    %v73 = vpack.c.b16 %v62, %v61
    %v74 = vpack.c.b16 %v64, %v63
    %v75 = vpack.c.b16 %v66, %v65
    %v76 = vpack.c.b16 %v68, %v67
    %v81 = vunpack.c.l.b16 %v32
    %v82 = vunpack.c.h.b16 %v32
    %v83 = vunpack.c.l.b16 %v33
    %v84 = vunpack.c.h.b16 %v33
    %v85 = vunpack.c.l.b16 %v34
    %v86 = vunpack.c.h.b16 %v34
    %v87 = vunpack.c.l.b16 %v35
    %v88 = vunpack.c.h.b16 %v35
    %v89 = vpack.c.b16 %v83, %v81
    %v90 = vpack.c.b16 %v84, %v82
    %v91 = vpack.c.b16 %v87, %v85
    %v92 = vpack.c.b16 %v88, %v86
    %vm97 = vcmask 261120
    %v99 = vsel %vm97, %v69, 0
    %v102 = vsel %vm97, %v70, 0
    %v105 = vsel %vm97, %v71, 0
    %v108 = vsel %vm97, %v72, 0
    %v111 = vsel %vm97, %v73, 0
    %v114 = vsel %vm97, %v74, 0
    %v117 = vsel %vm97, %v75, 0
    %v120 = vsel %vm97, %v76, 0
    %122 = vmatpush.bf16.msra.mxu0 0
    %123 = vmatpush.bf16.msra.mxu0 0
    %124 = vmatpush.bf16.msra.mxu0 0
    %125 = vmatpush.bf16.msra.mxu0 0
    %126 = vmatpush.bf16.msra.mxu0 0
    %127 = vmatpush.bf16.msra.mxu0 0
    %128 = vmatpush.bf16.msra.mxu0 %v91
    %129 = vmatpush.bf16.msra.mxu0 %v89
    %130 = vmatmul.bf16.gmra.mxu0 %v99
    %v131 = vpop.f32.mrf.mxu0
    %v132 = vadd.f32 0.0, %v131
    %v133 = vpop.f32.mrf.mxu0
    %v134 = vadd.f32 0.0, %v133
    %135 = vmatmul.bf16.gmra.mxu0 %v102
    %v136 = vpop.f32.mrf.mxu0
    %v137 = vadd.f32 0.0, %v136
    %v138 = vpop.f32.mrf.mxu0
    %v139 = vadd.f32 0.0, %v138
    %140 = vmatmul.bf16.gmra.mxu0 %v105
    %v141 = vpop.f32.mrf.mxu0
    %v142 = vadd.f32 0.0, %v141
    %v143 = vpop.f32.mrf.mxu0
    %v144 = vadd.f32 0.0, %v143
    %145 = vmatmul.bf16.gmra.mxu0 %v108
    %v146 = vpop.f32.mrf.mxu0
    %v147 = vadd.f32 0.0, %v146
    %v148 = vpop.f32.mrf.mxu0
    %v149 = vadd.f32 0.0, %v148
    %150 = vmatmul.bf16.gmra.mxu0 %v111
    %v151 = vpop.f32.mrf.mxu0
    %v152 = vadd.f32 0.0, %v151
    %v153 = vpop.f32.mrf.mxu0
    %v154 = vadd.f32 0.0, %v153
    %155 = vmatmul.bf16.gmra.mxu0 %v114
    %v156 = vpop.f32.mrf.mxu0
    %v157 = vadd.f32 0.0, %v156
    %v158 = vpop.f32.mrf.mxu0
    %v159 = vadd.f32 0.0, %v158
    %160 = vmatmul.bf16.gmra.mxu0 %v117
    %v161 = vpop.f32.mrf.mxu0
    %v162 = vadd.f32 0.0, %v161
    %v163 = vpop.f32.mrf.mxu0
    %v164 = vadd.f32 0.0, %v163
    %165 = vmatmul.bf16.gmra.mxu0 %v120
    %v166 = vpop.f32.mrf.mxu0
    %v167 = vadd.f32 0.0, %v166
    %v168 = vpop.f32.mrf.mxu0
    %v169 = vadd.f32 0.0, %v168
    %170 = vdwg.mxu0
    %171 = vmatpush.bf16.msra.mxu0 0
    %172 = vmatpush.bf16.msra.mxu0 0
    %173 = vmatpush.bf16.msra.mxu0 0
    %174 = vmatpush.bf16.msra.mxu0 0
    %175 = vmatpush.bf16.msra.mxu0 0
    %176 = vmatpush.bf16.msra.mxu0 0
    %177 = vmatpush.bf16.msra.mxu0 %v92
    %178 = vmatpush.bf16.msra.mxu0 %v90
    %179 = vmatmul.bf16.gmra.mxu0 %v99
    %v180 = vpop.f32.mrf.mxu0
    %v181 = vadd.f32 0.0, %v180
    %v182 = vpop.f32.mrf.mxu0
    %v183 = vadd.f32 0.0, %v182
    %184 = vmatmul.bf16.gmra.mxu0 %v102
    %v185 = vpop.f32.mrf.mxu0
    %v186 = vadd.f32 0.0, %v185
    %v187 = vpop.f32.mrf.mxu0
    %v188 = vadd.f32 0.0, %v187
    %189 = vmatmul.bf16.gmra.mxu0 %v105
    %v190 = vpop.f32.mrf.mxu0
    %v191 = vadd.f32 0.0, %v190
    %v192 = vpop.f32.mrf.mxu0
    %v193 = vadd.f32 0.0, %v192
    %194 = vmatmul.bf16.gmra.mxu0 %v108
    %v195 = vpop.f32.mrf.mxu0
    %v196 = vadd.f32 0.0, %v195
    %v197 = vpop.f32.mrf.mxu0
    %v198 = vadd.f32 0.0, %v197
    %199 = vmatmul.bf16.gmra.mxu0 %v111
    %v200 = vpop.f32.mrf.mxu0
    %v201 = vadd.f32 0.0, %v200
    %v202 = vpop.f32.mrf.mxu0
    %v203 = vadd.f32 0.0, %v202
    %204 = vmatmul.bf16.gmra.mxu0 %v114
    %v205 = vpop.f32.mrf.mxu0
    %v206 = vadd.f32 0.0, %v205
    %v207 = vpop.f32.mrf.mxu0
    %v208 = vadd.f32 0.0, %v207
    %209 = vmatmul.bf16.gmra.mxu0 %v117
    %v210 = vpop.f32.mrf.mxu0
    %v211 = vadd.f32 0.0, %v210
    %v212 = vpop.f32.mrf.mxu0
    %v213 = vadd.f32 0.0, %v212
    %214 = vmatmul.bf16.gmra.mxu0 %v120
    %v215 = vpop.f32.mrf.mxu0
    %v216 = vadd.f32 0.0, %v215
    %v217 = vpop.f32.mrf.mxu0
    %v218 = vadd.f32 0.0, %v217
    %219 = vdwg.mxu0
    %v220 = vtanh.pop %v132
    %v221 = vtanh.pop %v181
    %v222 = vtanh.pop %v134
    %v223 = vtanh.pop %v183
    %v224 = vtanh.pop %v137
    %v225 = vtanh.pop %v186
    %v226 = vtanh.pop %v139
    %v227 = vtanh.pop %v188
    %v228 = vtanh.pop %v142
    %v229 = vtanh.pop %v191
    %v230 = vtanh.pop %v144
    %v231 = vtanh.pop %v193
    %v232 = vtanh.pop %v147
    %v233 = vtanh.pop %v196
    %v234 = vtanh.pop %v149
    %v235 = vtanh.pop %v198
    %v236 = vtanh.pop %v152
    %v237 = vtanh.pop %v201
    %v238 = vtanh.pop %v154
    %v239 = vtanh.pop %v203
    %v240 = vtanh.pop %v157
    %v241 = vtanh.pop %v206
    %v242 = vtanh.pop %v159
    %v243 = vtanh.pop %v208
    %v244 = vtanh.pop %v162
    %v245 = vtanh.pop %v211
    %v246 = vtanh.pop %v164
    %v247 = vtanh.pop %v213
    %v248 = vtanh.pop %v167
    %v249 = vtanh.pop %v216
    %v250 = vtanh.pop %v169
    %v251 = vtanh.pop %v218
    %v252 = vpack.c.bf16 %v222, %v220
    %v253 = vpack.c.bf16 %v223, %v221
    %v254 = vpack.c.bf16 %v226, %v224
    %v255 = vpack.c.bf16 %v227, %v225
    %v256 = vpack.c.bf16 %v230, %v228
    %v257 = vpack.c.bf16 %v231, %v229
    %v258 = vpack.c.bf16 %v234, %v232
    %v259 = vpack.c.bf16 %v235, %v233
    %v260 = vpack.c.bf16 %v238, %v236
    %v261 = vpack.c.bf16 %v239, %v237
    %v262 = vpack.c.bf16 %v242, %v240
    %v263 = vpack.c.bf16 %v243, %v241
    %v264 = vpack.c.bf16 %v246, %v244
    %v265 = vpack.c.bf16 %v247, %v245
    %v266 = vpack.c.bf16 %v250, %v248
    %v267 = vpack.c.bf16 %v251, %v249
    %v269 = vunpack.c.l.b16 %v36
    %v270 = vunpack.c.h.b16 %v36
    %v271 = vpack.c.b16 %v269, %v269
    %v272 = vpack.c.b16 %v270, %v270
    %275 = vmatpush.bf16.xpose.msra.mxu0 %v266
    %276 = vmatpush.bf16.xpose.msra.mxu0 %v264
    %277 = vmatpush.bf16.xpose.msra.mxu0 %v262
    %278 = vmatpush.bf16.xpose.msra.mxu0 %v260
    %279 = vmatpush.bf16.xpose.msra.mxu0 %v258
    %280 = vmatpush.bf16.xpose.msra.mxu0 %v256
    %281 = vmatpush.bf16.xpose.msra.mxu0 %v254
    %282 = vmatpush.bf16.xpose.msra.mxu0 %v252
    %283 = vmatmul.bf16.gmra.mxu0 %v271
    %v284 = vpop.f32.mrf.mxu0
    %v285 = vadd.f32 0.0, %v284
    %v286 = vpop.f32.mrf.mxu0
    %287 = vdwg.mxu0
    %288 = vmatpush.bf16.xpose.msra.mxu0 %v267
    %289 = vmatpush.bf16.xpose.msra.mxu0 %v265
    %290 = vmatpush.bf16.xpose.msra.mxu0 %v263
    %291 = vmatpush.bf16.xpose.msra.mxu0 %v261
    %292 = vmatpush.bf16.xpose.msra.mxu0 %v259
    %293 = vmatpush.bf16.xpose.msra.mxu0 %v257
    %294 = vmatpush.bf16.xpose.msra.mxu0 %v255
    %295 = vmatpush.bf16.xpose.msra.mxu0 %v253
    %296 = vmatmul.bf16.gmra.mxu0 %v272
    %v297 = vpop.f32.mrf.mxu0
    %v298 = vadd.f32 %v285, %v297
    %v299 = vpop.f32.mrf.mxu0
    %300 = vdwg.mxu0
    %vm301 = vcmask 130048
    %v302 = vsel %vm301, %v298, -inf
    %303 = vmax.xlane.f32.xlu0 %v302
    %v304 = vpop.xlane.xlu0 %303
    %v305 = vsub.f32 %v298, %v304
    %v306 = vmul.f32 %v305, 1.442695
    %v307 = vpow.pop %v306
    %v308 = vsel %vm301, %v307, 0.0
    %309 = vadd.xlane.f32.xlu0 %v308
    %v310 = vpop.xlane.xlu0 %309
    %v311 = vrcp.pop %v310
    %v312 = vmul.f32 %v307, %v311
    %v313 = vpack.c.bf16 %v312, %v312
    %v316 = vsel %vm301, %v313, 0
    %318 = vmatpush.bf16.msra.mxu0 0
    %319 = vmatpush.bf16.msra.mxu0 0
    %320 = vmatpush.bf16.msra.mxu0 0
    %321 = vmatpush.bf16.msra.mxu0 0
    %322 = vmatpush.bf16.msra.mxu0 0
    %323 = vmatpush.bf16.msra.mxu0 0
    %324 = vmatpush.bf16.msra.mxu0 0
    %325 = vmatpush.bf16.msra.mxu0 %v69
    %326 = vmatmul.bf16.gmra.mxu0 %v316
    %v327 = vpop.f32.mrf.mxu0
    %v328 = vadd.f32 0.0, %v327
    %v329 = vpop.f32.mrf.mxu0
    %330 = vdwg.mxu0
    %vm331 = vcmask 261248
    %v332 = vsel %vm331, %v298, -inf
    %333 = vmax.xlane.f32.xlu0 %v332
    %v334 = vpop.xlane.xlu0 %333
    %v335 = vsub.f32 %v298, %v334
    %v336 = vmul.f32 %v335, 1.442695
    %v337 = vpow.pop %v336
    %339 = vrot.lane.b32.xlu0 %v337, 112
    %v340 = vpop.permute.xlu0 %339
    %v342 = vsel %vm301, %v340, 0.0
    %343 = vadd.xlane.f32.xlu0 %v342
    %v344 = vpop.xlane.xlu0 %343
    %v345 = vrcp.pop %v344
    %v346 = vmul.f32 %v337, %v345
    %v347 = vpack.c.bf16 %v346, %v346
    %349 = vrot.lane.b32.xlu0 %v347, 112
    %v350 = vpop.permute.xlu0 %349
    %v353 = vsel %vm301, %v350, 0
    %355 = vmatpush.bf16.msra.mxu0 0
    %356 = vmatpush.bf16.msra.mxu0 0
    %357 = vmatpush.bf16.msra.mxu0 0
    %358 = vmatpush.bf16.msra.mxu0 0
    %359 = vmatpush.bf16.msra.mxu0 0
    %360 = vmatpush.bf16.msra.mxu0 0
    %361 = vmatpush.bf16.msra.mxu0 0
    %362 = vmatpush.bf16.msra.mxu0 %v70
    %363 = vmatmul.bf16.gmra.mxu0 %v353
    %v364 = vpop.f32.mrf.mxu0
    %v365 = vadd.f32 0.0, %v364
    %v366 = vpop.f32.mrf.mxu0
    %367 = vdwg.mxu0
    %vm368 = vcmask 392448
    %v369 = vsel %vm368, %v298, -inf
    %370 = vmax.xlane.f32.xlu0 %v369
    %v371 = vpop.xlane.xlu0 %370
    %v372 = vsub.f32 %v298, %v371
    %v373 = vmul.f32 %v372, 1.442695
    %v374 = vpow.pop %v373
    %376 = vrot.lane.b32.xlu0 %v374, 96
    %v377 = vpop.permute.xlu0 %376
    %v379 = vsel %vm301, %v377, 0.0
    %380 = vadd.xlane.f32.xlu0 %v379
    %v381 = vpop.xlane.xlu0 %380
    %v382 = vrcp.pop %v381
    %v383 = vmul.f32 %v374, %v382
    %v384 = vpack.c.bf16 %v383, %v383
    %386 = vrot.lane.b32.xlu0 %v384, 96
    %v387 = vpop.permute.xlu0 %386
    %v390 = vsel %vm301, %v387, 0
    %392 = vmatpush.bf16.msra.mxu0 0
    %393 = vmatpush.bf16.msra.mxu0 0
    %394 = vmatpush.bf16.msra.mxu0 0
    %395 = vmatpush.bf16.msra.mxu0 0
    %396 = vmatpush.bf16.msra.mxu0 0
    %397 = vmatpush.bf16.msra.mxu0 0
    %398 = vmatpush.bf16.msra.mxu0 0
    %399 = vmatpush.bf16.msra.mxu0 %v71
    %400 = vmatmul.bf16.gmra.mxu0 %v390
    %v401 = vpop.f32.mrf.mxu0
    %v402 = vadd.f32 0.0, %v401
    %v403 = vpop.f32.mrf.mxu0
    %404 = vdwg.mxu0
    %vm405 = vcmask 523648
    %v406 = vsel %vm405, %v298, -inf
    %407 = vmax.xlane.f32.xlu0 %v406
    %v408 = vpop.xlane.xlu0 %407
    %v409 = vsub.f32 %v298, %v408
    %v410 = vmul.f32 %v409, 1.442695
    %v411 = vpow.pop %v410
    %413 = vrot.lane.b32.xlu0 %v411, 80
    %v414 = vpop.permute.xlu0 %413
    %v416 = vsel %vm301, %v414, 0.0
    %417 = vadd.xlane.f32.xlu0 %v416
    %v418 = vpop.xlane.xlu0 %417
    %v419 = vrcp.pop %v418
    %v420 = vmul.f32 %v411, %v419
    %v421 = vpack.c.bf16 %v420, %v420
    %423 = vrot.lane.b32.xlu0 %v421, 80
    %v424 = vpop.permute.xlu0 %423
    %v427 = vsel %vm301, %v424, 0
    %429 = vmatpush.bf16.msra.mxu0 0
    %430 = vmatpush.bf16.msra.mxu0 0
    %431 = vmatpush.bf16.msra.mxu0 0
    %432 = vmatpush.bf16.msra.mxu0 0
    %433 = vmatpush.bf16.msra.mxu0 0
    %434 = vmatpush.bf16.msra.mxu0 0
    %435 = vmatpush.bf16.msra.mxu0 0
    %436 = vmatpush.bf16.msra.mxu0 %v72
    %437 = vmatmul.bf16.gmra.mxu0 %v427
    %v438 = vpop.f32.mrf.mxu0
    %v439 = vadd.f32 0.0, %v438
    %v440 = vpop.f32.mrf.mxu0
    %441 = vdwg.mxu0
    %vm442 = vcmask 654848
    %v443 = vsel %vm442, %v298, -inf
    %444 = vmax.xlane.f32.xlu0 %v443
    %v445 = vpop.xlane.xlu0 %444
    %v446 = vsub.f32 %v298, %v445
    %v447 = vmul.f32 %v446, 1.442695
    %v448 = vpow.pop %v447
    %450 = vrot.lane.b32.xlu0 %v448, 64
    %v451 = vpop.permute.xlu0 %450
    %v453 = vsel %vm301, %v451, 0.0
    %454 = vadd.xlane.f32.xlu0 %v453
    %v455 = vpop.xlane.xlu0 %454
    %v456 = vrcp.pop %v455
    %v457 = vmul.f32 %v448, %v456
    %v458 = vpack.c.bf16 %v457, %v457
    %460 = vrot.lane.b32.xlu0 %v458, 64
    %v461 = vpop.permute.xlu0 %460
    %v464 = vsel %vm301, %v461, 0
    %466 = vmatpush.bf16.msra.mxu0 0
    %467 = vmatpush.bf16.msra.mxu0 0
    %468 = vmatpush.bf16.msra.mxu0 0
    %469 = vmatpush.bf16.msra.mxu0 0
    %470 = vmatpush.bf16.msra.mxu0 0
    %471 = vmatpush.bf16.msra.mxu0 0
    %472 = vmatpush.bf16.msra.mxu0 0
    %473 = vmatpush.bf16.msra.mxu0 %v73
    %474 = vmatmul.bf16.gmra.mxu0 %v464
    %v475 = vpop.f32.mrf.mxu0
    %v476 = vadd.f32 0.0, %v475
    %v477 = vpop.f32.mrf.mxu0
    %478 = vdwg.mxu0
    %vm479 = vcmask 786048
    %v480 = vsel %vm479, %v298, -inf
    %481 = vmax.xlane.f32.xlu0 %v480
    %v482 = vpop.xlane.xlu0 %481
    %v483 = vsub.f32 %v298, %v482
    %v484 = vmul.f32 %v483, 1.442695
    %v485 = vpow.pop %v484
    %487 = vrot.lane.b32.xlu0 %v485, 48
    %v488 = vpop.permute.xlu0 %487
    %v490 = vsel %vm301, %v488, 0.0
    %491 = vadd.xlane.f32.xlu0 %v490
    %v492 = vpop.xlane.xlu0 %491
    %v493 = vrcp.pop %v492
    %v494 = vmul.f32 %v485, %v493
    %v495 = vpack.c.bf16 %v494, %v494
    %497 = vrot.lane.b32.xlu0 %v495, 48
    %v498 = vpop.permute.xlu0 %497
    %v501 = vsel %vm301, %v498, 0
    %503 = vmatpush.bf16.msra.mxu0 0
    %504 = vmatpush.bf16.msra.mxu0 0
    %505 = vmatpush.bf16.msra.mxu0 0
    %506 = vmatpush.bf16.msra.mxu0 0
    %507 = vmatpush.bf16.msra.mxu0 0
    %508 = vmatpush.bf16.msra.mxu0 0
    %509 = vmatpush.bf16.msra.mxu0 0
    %510 = vmatpush.bf16.msra.mxu0 %v74
    %511 = vmatmul.bf16.gmra.mxu0 %v501
    %v512 = vpop.f32.mrf.mxu0
    %v513 = vadd.f32 0.0, %v512
    %v514 = vpop.f32.mrf.mxu0
    %515 = vdwg.mxu0
    %vm516 = vcmask 917248
    %v517 = vsel %vm516, %v298, -inf
    %518 = vmax.xlane.f32.xlu0 %v517
    %v519 = vpop.xlane.xlu0 %518
    %v520 = vsub.f32 %v298, %v519
    %v521 = vmul.f32 %v520, 1.442695
    %v522 = vpow.pop %v521
    %524 = vrot.lane.b32.xlu0 %v522, 32
    %v525 = vpop.permute.xlu0 %524
    %v527 = vsel %vm301, %v525, 0.0
    %528 = vadd.xlane.f32.xlu0 %v527
    %v529 = vpop.xlane.xlu0 %528
    %v530 = vrcp.pop %v529
    %v531 = vmul.f32 %v522, %v530
    %v532 = vpack.c.bf16 %v531, %v531
    %534 = vrot.lane.b32.xlu0 %v532, 32
    %v535 = vpop.permute.xlu0 %534
    %v538 = vsel %vm301, %v535, 0
    %540 = vmatpush.bf16.msra.mxu0 0
    %541 = vmatpush.bf16.msra.mxu0 0
    %542 = vmatpush.bf16.msra.mxu0 0
    %543 = vmatpush.bf16.msra.mxu0 0
    %544 = vmatpush.bf16.msra.mxu0 0
    %545 = vmatpush.bf16.msra.mxu0 0
    %546 = vmatpush.bf16.msra.mxu0 0
    %547 = vmatpush.bf16.msra.mxu0 %v75
    %548 = vmatmul.bf16.gmra.mxu0 %v538
    %v549 = vpop.f32.mrf.mxu0
    %v550 = vadd.f32 0.0, %v549
    %v551 = vpop.f32.mrf.mxu0
    %552 = vdwg.mxu0
    %vm553 = vcmask 1048448
    %v554 = vsel %vm553, %v298, -inf
    %555 = vmax.xlane.f32.xlu0 %v554
    %v556 = vpop.xlane.xlu0 %555
    %v557 = vsub.f32 %v298, %v556
    %v558 = vmul.f32 %v557, 1.442695
    %v559 = vpow.pop %v558
    %561 = vrot.lane.b32.xlu0 %v559, 16
    %v562 = vpop.permute.xlu0 %561
    %v564 = vsel %vm301, %v562, 0.0
    %565 = vadd.xlane.f32.xlu0 %v564
    %v566 = vpop.xlane.xlu0 %565
    %v567 = vrcp.pop %v566
    %v568 = vmul.f32 %v559, %v567
    %v569 = vpack.c.bf16 %v568, %v568
    %571 = vrot.lane.b32.xlu0 %v569, 16
    %v572 = vpop.permute.xlu0 %571
    %v575 = vsel %vm301, %v572, 0
    %577 = vmatpush.bf16.msra.mxu0 0
    %578 = vmatpush.bf16.msra.mxu0 0
    %579 = vmatpush.bf16.msra.mxu0 0
    %580 = vmatpush.bf16.msra.mxu0 0
    %581 = vmatpush.bf16.msra.mxu0 0
    %582 = vmatpush.bf16.msra.mxu0 0
    %583 = vmatpush.bf16.msra.mxu0 0
    %584 = vmatpush.bf16.msra.mxu0 %v76
    %585 = vmatmul.bf16.gmra.mxu0 %v575
    %v586 = vpop.f32.mrf.mxu0
    %v587 = vadd.f32 0.0, %v586
    %v588 = vpop.f32.mrf.mxu0
    %589 = vdwg.mxu0
    %591 = vrot.lane.b32.xlu0 %v365, 32
    %v592 = vpop.permute.xlu0 %591
    %595 = vrot.lane.b32.xlu0 %v402, 64
    %v596 = vpop.permute.xlu0 %595
    %599 = vrot.lane.b32.xlu0 %v439, 96
    %v600 = vpop.permute.xlu0 %599
    %603 = vrot.lane.b32.xlu0 %v513, 32
    %v604 = vpop.permute.xlu0 %603
    %607 = vrot.lane.b32.xlu0 %v550, 64
    %v608 = vpop.permute.xlu0 %607
    %611 = vrot.lane.b32.xlu0 %v587, 96
    %v612 = vpop.permute.xlu0 %611
    %v614 = vsel %vm97, %v328, %v592
    %vm615 = vcmask 523264
    %v616 = vsel %vm615, %v614, %v596
    %vm617 = vcmask 785408
    %v618 = vsel %vm617, %v616, %v600
    %v619 = vsel %vm97, %v476, %v604
    %v620 = vsel %vm615, %v619, %v608
    %v621 = vsel %vm617, %v620, %v612
    %622 = vst [vmem:[#allocation2] sm:$0xff] %v618
    %623 = vst [vmem:[#allocation2 + $0x8] sm:$0xff] %v621
    // Predicated region
    $region14: #{tpu_custom_call.1} parent=1 // pred_check
      _
    $region15: #{tpu_custom_call.1} parent=1 // pred_check_branch
      %625 = sbr.rel (0) target = $region17
    $region16: #{tpu_custom_call.1} parent=1 // pred_region
      %627 = vsyncadd [#allocation3], 0
      %s629 = sshll.u32 [#allocation2], 4
      %s630 = int_to_ptr.vmem [resolvable:$true] %s629
      %s631 = sshll.u32 %s3, 4
      %s632 = int_to_ptr.hbm [resolvable:$true] %s631
      %634 = dma.vmem_to_hbm [thread:$0]  %s630, 256, %s632, [#allocation3]
    $region17: #{tpu_custom_call.1} parent=1 // pred_fallthru
      _
    // Predicated region
    $region18: #{tpu_custom_call.1} parent=1 // pred_check
      _
    $region19: #{tpu_custom_call.1} parent=1 // pred_check_branch
      %636 = sbr.rel (0) target = $region21
    $region20: #{tpu_custom_call.1} parent=1 // pred_region
      %638 = dma.done [#allocation3], 256
    $region21: #{tpu_custom_call.1} parent=1 // pred_fallthru
      _
    %639 = vsyncpa [#allocation3], 1

</llo_original>
